<compile_context>
chip_gen: v7x
topology: tpu7x:2x2x1
jax: 0.10.0
libtpu: 0.0.40
codegen_flags: <defaults>
</compile_context>

<pallas_src>
import functools
import math

import jax
import jax.numpy as jnp
from jax.experimental import pallas as pl
from jax.experimental.pallas import tpu as pltpu


def _round_up(x, m):
    return ((x + m - 1) // m) * m


def _num_tensorcores():
    """Best-effort per-chip TensorCore count (v7x has 2, v5e/v6e have 1)."""
    try:
        kind = jax.devices()[0].device_kind.lower()
        if "v7" in kind:
            return 2
    except Exception:
        pass
    return 1


# ------------------------------------------------------------------ kernel

def _timestep_embedding_kernel(*refs, has_bias):
    """One fused step:  o[i, j] = SiLU(x[i] @ W1 [+ b1]) @ W2[:, j].

    x_ref : (tm, in_dim)    bf16/f32
    w1_ref: (in_dim, mid)   bf16/f32   (fully resident, never re-streamed)
    b1_ref: (1, mid)        f32        (only if has_bias)
    w2_ref: (mid, tn)       bf16/f32
    o_ref : (tm, tn)        f32 (sample dtype)

    There is no reduction grid axis, so no accumulator scratch, no
    init/finalize phases, and every store is a full lane-dense tile.
    """
    if has_bias:
        x_ref, w1_ref, b1_ref, w2_ref, o_ref = refs
    else:
        x_ref, w1_ref, w2_ref, o_ref = refs

    # linear_1 on the MXU with f32 accumulation; bias + SiLU in f32 (VPU/EUP).
    h = jnp.dot(x_ref[...], w1_ref[...], preferred_element_type=jnp.float32)
    if has_bias:
        h = h + b1_ref[...].astype(jnp.float32)
    h = h * jax.nn.sigmoid(h)

    # linear_2 over this column tile of W2.  h is cast to the weight dtype for
    # the MXU (bf16); accumulation stays f32.  (Kernel is weight-DMA bound, so
    # keeping h in f32 would also be fine accuracy-wise if ever needed.)
    out = jnp.dot(h.astype(w2_ref.dtype), w2_ref[...],
                  preferred_element_type=jnp.float32)
    o_ref[...] = out.astype(o_ref.dtype)


# ----------------------------------------------------------------- wrapper

def timestep_embedding_forward(sample, params, *, use_adaln_lora=False,
                               tm_cap=512, tn_cap=512):
    """sample: (B, T, in_dim).  Returns (emb_B_T_D, adaln_lora_B_T_3D)."""
    B, T, in_dim = sample.shape
    w1 = params["w1"]                      # (in_dim, mid)
    w2 = params["w2"]                      # (mid, out2)
    b1 = params.get("b1", None)            # (mid,) or None (lora path: no bias)
    has_bias = b1 is not None
    mid = w1.shape[1]
    out2 = w2.shape[1]
    rows = B * T

    # ---- tile selection: sublane tiles multiple of 8, lane tiles multiple of
    # 128 (or the full dim) -> always (8,128)-aligned, lane-dense stores.
    tm = _round_up(rows, 8) if rows <= tm_cap else tm_cap
    rows_p = _round_up(rows, tm)
    grid_i = rows_p // tm

    num_tc = _num_tensorcores()
    out2_p = _round_up(out2, 128)
    # Keep the (double-buffered) W2 tile comfortably inside VMEM on every gen.
    w2_col_bytes = mid * w2.dtype.itemsize
    vmem_tn = max(128, ((8 * 1024 * 1024) // max(w2_col_bytes, 1)) // 128 * 128)
    cap = min(tn_cap, vmem_tn)
    # At least one column tile per TensorCore (v7x), otherwise as few as fit.
    want_tiles = max(num_tc, pl.cdiv(out2_p, cap))
    tn = min(_round_up(pl.cdiv(out2_p, want_tiles), 128), out2_p)
    out2_pp = _round_up(out2_p, tn)
    grid_j = out2_pp // tn

    # TODO(synk): if in_dim * mid ever exceeds VMEM (not the case for any
    # TimestepEmbedding config), reintroduce a k-reduction axis for W1.

    x2 = sample.reshape(rows, in_dim).astype(w1.dtype)   # tiny; cheap cast
    if rows_p != rows:
        x2 = jnp.pad(x2, ((0, rows_p - rows), (0, 0)))
    w2p = w2
    if out2_pp != out2:       # only when out2 is not a multiple of tn (rare)
        w2p = jnp.pad(w2, ((0, 0), (0, out2_pp - out2)))

    kernel = functools.partial(_timestep_embedding_kernel, has_bias=has_bias)

    in_specs = [
        pl.BlockSpec((tm, in_dim), lambda i, j: (i, 0)),
        pl.BlockSpec((in_dim, mid), lambda i, j: (0, 0)),   # W1 fully resident
    ]
    args = [x2, w1]
    if has_bias:
        in_specs.append(pl.BlockSpec((1, mid), lambda i, j: (0, 0)))
        args.append(b1.reshape(1, mid).astype(jnp.float32))
    in_specs.append(pl.BlockSpec((mid, tn), lambda i, j: (0, j)))
    args.append(w2p)

    emb2 = pl.pallas_call(
        kernel,
        out_shape=jax.ShapeDtypeStruct((rows_p, out2_pp), sample.dtype),
        grid_spec=pltpu.PrefetchScalarGridSpec(
            num_scalar_prefetch=0,
            grid=(grid_i, grid_j),
            in_specs=in_specs,
            out_specs=pl.BlockSpec((tm, tn), lambda i, j: (i, j)),
        ),
        compiler_params=pltpu.CompilerParams(
            dimension_semantics=("parallel", "parallel"),
            vmem_limit_bytes=48 * 1024 * 1024,
        ),
    )(*args)

    emb = emb2[:rows, :out2].reshape(B, T, out2)
    if use_adaln_lora:
        # Reference returns the untouched sample as emb_B_T_D here; only the
        # 3*D lora tensor comes from the MLP.
        return sample, emb
    return emb, None


# --------------------------------------------------------------- reference

def timestep_embedding_reference(sample, params, *, use_adaln_lora=False):
    w1 = params["w1"].astype(jnp.float32)
    w2 = params["w2"].astype(jnp.float32)
    h = jnp.dot(sample.astype(jnp.float32), w1)
    if params.get("b1", None) is not None:
        h = h + params["b1"].astype(jnp.float32)
    h = h * jax.nn.sigmoid(h)
    emb = jnp.dot(h, w2)
    if use_adaln_lora:
        return sample, emb
    return emb, None


# ------------------------------------------------------------------- setup

def init_params(key, in_features, out_features, use_adaln_lora):
    """Weights are stored in bf16 ONCE (no per-call wrapper cast); bias in f32."""
    k1, k2, k3 = jax.random.split(key, 3)
    out2 = 3 * out_features if use_adaln_lora else out_features
    w1 = (jax.random.normal(k1, (in_features, out_features), jnp.float32)
          * (1.0 / math.sqrt(in_features))).astype(jnp.bfloat16)
    w2 = (jax.random.normal(k2, (out_features, out2), jnp.float32)
          * (1.0 / math.sqrt(out_features))).astype(jnp.bfloat16)
    params = {"w1": w1, "w2": w2}
    if not use_adaln_lora:
        # bias enabled iff no AdaLN-LoRA (matches the reference module).
        params["b1"] = 0.1 * jax.random.normal(k3, (out_features,), jnp.float32)
    return params


if __name__ == "__main__":
    B, T = 2, 8
    in_features = 64
    out_features = 256

    key = jax.random.PRNGKey(0)
    ks, kp1, kp2 = jax.random.split(key, 3)
    sample = jax.random.normal(ks, (B, T, in_features), jnp.float32)

    ok = True
    for use_adaln_lora, kp in ((False, kp1), (True, kp2)):
        params = init_params(kp, in_features, out_features, use_adaln_lora)

        fwd = jax.jit(functools.partial(timestep_embedding_forward,
                                        use_adaln_lora=use_adaln_lora))
        emb, lora = fwd(sample, params)
        jax.block_until_ready((emb, lora))

        ref_emb, ref_lora = timestep_embedding_reference(
            sample, params, use_adaln_lora=use_adaln_lora)

        if use_adaln_lora:
            assert lora is not None and lora.shape == (B, T, 3 * out_features)
            assert emb.shape == sample.shape
            assert bool(jnp.all(jnp.isfinite(lora)))
            err = float(jnp.max(jnp.abs(lora.astype(jnp.float32) - ref_lora)))
        else:
            assert lora is None
            assert emb.shape == (B, T, out_features)
            assert bool(jnp.all(jnp.isfinite(emb)))
            err = float(jnp.max(jnp.abs(emb.astype(jnp.float32) - ref_emb)))
        # bf16 MXU operands with f32 accumulation -> small tolerance.
        ok = ok and (err < 5e-2)

    assert ok
    print("KERNEL_OK")
</pallas_src>

<mosaic_0001>
module attributes {stable_mosaic.version = 11 : i64} {
  func.func @_timestep_embedding_kernel(%arg0: i32, %arg1: i32, %arg2: memref<16x64xbf16, #tpu.memory_space<vmem>>, %arg3: memref<64x256xbf16, #tpu.memory_space<vmem>>, %arg4: memref<1x256xf32, #tpu.memory_space<vmem>>, %arg5: memref<256x256xbf16, #tpu.memory_space<vmem>>, %arg6: memref<16x256xf32, #tpu.memory_space<vmem>>) attributes {dimension_semantics = [#tpu.dimension_semantics<parallel>, #tpu.dimension_semantics<parallel>], iteration_bounds = array<i64: 1, 1>, scalar_prefetch = 0 : i64, scratch_operands = 0 : i64, tpu.core_type = #tpu.core_type<tc>, window_params = [{transform_indices = @transform_0, window_bounds = array<i64: 16, 64>}, {pipeline_mode = #tpu.pipeline_mode<synchronous>, transform_indices = @transform_1, window_bounds = array<i64: 64, 256>}, {pipeline_mode = #tpu.pipeline_mode<synchronous>, transform_indices = @transform_2, window_bounds = array<i64: 1, 256>}, {transform_indices = @transform_3, window_bounds = array<i64: 256, 256>}, {transform_indices = @transform_4, window_bounds = array<i64: 16, 256>}]} {
    %c0 = arith.constant 0 : index
    %c0_0 = arith.constant 0 : index
    %0 = vector.load %arg2[%c0, %c0_0] : memref<16x64xbf16, #tpu.memory_space<vmem>>, vector<16x64xbf16>
    %c0_1 = arith.constant 0 : index
    %c0_2 = arith.constant 0 : index
    %1 = vector.load %arg3[%c0_1, %c0_2] : memref<64x256xbf16, #tpu.memory_space<vmem>>, vector<64x256xbf16>
    %cst = arith.constant dense<0.000000e+00> : vector<16x256xf32>
    %2 = tpu.matmul %0, %1, %cst {dimension_numbers = #tpu.dot_dimension_numbers<[1], [0], [0], [1], [0, 0, 1, 1], [], []>} : vector<16x64xbf16>, vector<64x256xbf16>, vector<16x256xf32> -> vector<16x256xf32>
    %c0_3 = arith.constant 0 : index
    %c0_4 = arith.constant 0 : index
    %3 = vector.load %arg4[%c0_3, %c0_4] : memref<1x256xf32, #tpu.memory_space<vmem>>, vector<1x256xf32>
    %4 = vector.broadcast %3 : vector<1x256xf32> to vector<16x256xf32>
    %5 = arith.addf %2, %4 : vector<16x256xf32>
    %6 = arith.negf %5 : vector<16x256xf32>
    %7 = math.exp %6 : vector<16x256xf32>
    %cst_5 = arith.constant 1.000000e+00 : f32
    %8 = vector.broadcast %cst_5 : f32 to vector<16x256xf32>
    %9 = arith.addf %8, %7 : vector<16x256xf32>
    %10 = arith.divf %8, %9 : vector<16x256xf32>
    %11 = arith.mulf %5, %10 : vector<16x256xf32>
    %12 = arith.truncf %11 : vector<16x256xf32> to vector<16x256xbf16>
    %c0_6 = arith.constant 0 : index
    %c0_7 = arith.constant 0 : index
    %13 = vector.load %arg5[%c0_6, %c0_7] : memref<256x256xbf16, #tpu.memory_space<vmem>>, vector<256x256xbf16>
    %cst_8 = arith.constant dense<0.000000e+00> : vector<16x256xf32>
    %14 = tpu.matmul %12, %13, %cst_8 {dimension_numbers = #tpu.dot_dimension_numbers<[1], [0], [0], [1], [0, 0, 1, 1], [], []>} : vector<16x256xbf16>, vector<256x256xbf16>, vector<16x256xf32> -> vector<16x256xf32>
    %c0_9 = arith.constant 0 : index
    %c0_10 = arith.constant 0 : index
    %15 = vector.load %arg6[%c0_9, %c0_10] : memref<16x256xf32, #tpu.memory_space<vmem>>, vector<16x256xf32>
    tpu.vector_store %arg6[%c0_9, %c0_10], %14 {strides = array<i32>} : memref<16x256xf32, #tpu.memory_space<vmem>>, vector<16x256xf32>,
    return
  }
  func.func @transform_0(%arg0: i32, %arg1: i32) -> (i32, i32) {
    %c0_i32 = arith.constant 0 : i32
    %c0_i32_0 = arith.constant 0 : i32
    return %arg0, %c0_i32 : i32, i32
  }
  func.func @transform_1(%arg0: i32, %arg1: i32) -> (i32, i32) {
    %c0_i32 = arith.constant 0 : i32
    %c0_i32_0 = arith.constant 0 : i32
    %c0_i32_1 = arith.constant 0 : i32
    return %c0_i32, %c0_i32_0 : i32, i32
  }
  func.func @transform_2(%arg0: i32, %arg1: i32) -> (i32, i32) {
    %c0_i32 = arith.constant 0 : i32
    %c0_i32_0 = arith.constant 0 : i32
    %c0_i32_1 = arith.constant 0 : i32
    return %c0_i32, %c0_i32_0 : i32, i32
  }
  func.func @transform_3(%arg0: i32, %arg1: i32) -> (i32, i32) {
    %c0_i32 = arith.constant 0 : i32
    %c0_i32_0 = arith.constant 0 : i32
    return %c0_i32, %arg1 : i32, i32
  }
  func.func @transform_4(%arg0: i32, %arg1: i32) -> (i32, i32) {
    %c0_i32 = arith.constant 0 : i32
    return %arg0, %arg1 : i32, i32
  }
}

</mosaic_0001>

<llo_original>
// kernel: timestep_embedding_forward.1
$region0: #{timestep_embedding_forward.1}
  #allocation0 [shape = 'u32[]', space=smem, size = 0x4, offset = 0x4, fixed_abs, tag = 'smem constant byte address 0x4 - core index']
  #allocation1 [shape = 'u32[144,128]{1,0:T(1,128)}', space=vmem, size = 0x12000, scoped, tag = 'internal scratch']
  %s0 = inlined_call_operand.vmem [shape: bf16[16,64], index: 0, kind: input, shape index: {}]
  %s1 = inlined_call_operand.hbm [shape: bf16[64,256], index: 1, kind: input, shape index: {}]
  %s2 = inlined_call_operand.vmem [shape: f32[1,256], index: 2, kind: input, shape index: {}]
  %s3 = inlined_call_operand.hbm [shape: bf16[256,256], index: 3, kind: input, shape index: {}]
  %s4 = inlined_call_operand.hbm [shape: f32[16,256], index: 4, kind: output, shape index: {}]
  %s5 = sld [smem:[#allocation0]]
  $region34: #{timestep_embedding_forward.1} parent=0
    _
  %s7 = ssub.s32 1, %s5
  %s8 = scalar_select 0, %s7, %s5
  $region1: #{timestep_embedding_forward.1} parent=0
    #allocation2 [shape = 'u8[32768]{0}', space=vmem, size = 0x8000, scoped, tag = 'input window, operand 1, single buffered']
    #allocation3 [shape = 's32[1]{0}', space=sflag, size = 0x4, scoped, tag = 'scoped memory for timestep_embedding_forward.1']
    #allocation4 [shape = 's32[1]{0}', space=sflag, size = 0x4, scoped, tag = 'scoped memory for timestep_embedding_forward.1']
    #allocation5 [shape = 'u8[131072]{0}', space=vmem, size = 0x20000, scoped, tag = 'input window, operand 3, single buffered']
    #allocation6 [shape = 's32[1]{0}', space=sflag, size = 0x4, scoped, tag = 'scoped memory for timestep_embedding_forward.1']
    #allocation7 [shape = 'u8[16384]{0}', space=vmem, size = 0x4000, scoped, tag = 'output window, operand 0, single buffered']
    %9 = vsyncpa [#allocation3], 0
    %10 = vsyncpa [#allocation6], 0
    %11 = vsyncpa [#allocation4], 0
    // Predicated region
    $region2: #{timestep_embedding_forward.1} parent=1 // pred_check
      _
    $region3: #{timestep_embedding_forward.1} parent=1 // pred_check_branch
      %13 = sbr.rel (0) target = $region5
    $region4: #{timestep_embedding_forward.1} parent=1 // pred_region
      _
    $region5: #{timestep_embedding_forward.1} parent=1 // pred_fallthru
      _
    // Predicated region
    $region6: #{timestep_embedding_forward.1} parent=1 // pred_check
      _
    $region7: #{timestep_embedding_forward.1} parent=1 // pred_check_branch
      %15 = sbr.rel (0) target = $region9
    $region8: #{timestep_embedding_forward.1} parent=1 // pred_region
      %s17 = ssub.s32 1024, 1024
      %18 = vsyncadd [#allocation3], %s17
      %s19 = sshll.u32 [#allocation2], 4
      %s20 = int_to_ptr.vmem [resolvable:$true] %s19
      %25 = dma.hbm_to_vmem [thread:$0]  %s1, 1024, %s20, [#allocation3], 128, 128, 8
    $region9: #{timestep_embedding_forward.1} parent=1 // pred_fallthru
      _
    // Predicated region
    $region10: #{timestep_embedding_forward.1} parent=1 // pred_check
      _
    $region11: #{timestep_embedding_forward.1} parent=1 // pred_check_branch
      %27 = sbr.rel (0) target = $region13
    $region12: #{timestep_embedding_forward.1} parent=1 // pred_region
      _
    $region13: #{timestep_embedding_forward.1} parent=1 // pred_fallthru
      _
    // Predicated region
    $region14: #{timestep_embedding_forward.1} parent=1 // pred_check
      _
    $region15: #{timestep_embedding_forward.1} parent=1 // pred_check_branch
      %29 = sbr.rel (0) target = $region17
    $region16: #{timestep_embedding_forward.1} parent=1 // pred_region
      %s31 = ssub.s32 4096, 4096
      %32 = vsyncadd [#allocation6], %s31
      %s33 = sshll.u32 [#allocation5], 4
      %s34 = int_to_ptr.vmem [resolvable:$true] %s33
      %39 = dma.hbm_to_vmem [thread:$0]  %s3, 4096, %s34, [#allocation6], 128, 128, 8
    $region17: #{timestep_embedding_forward.1} parent=1 // pred_fallthru
      _
    // Predicated region
    $region18: #{timestep_embedding_forward.1} parent=1 // pred_check
      _
    $region19: #{timestep_embedding_forward.1} parent=1 // pred_check_branch
      %41 = sbr.rel (0) target = $region21
    $region20: #{timestep_embedding_forward.1} parent=1 // pred_region
      %42 = dma.done [#allocation3], 1024
    $region21: #{timestep_embedding_forward.1} parent=1 // pred_fallthru
      _
    // Predicated region
    $region22: #{timestep_embedding_forward.1} parent=1 // pred_check
      _
    $region23: #{timestep_embedding_forward.1} parent=1 // pred_check_branch
      %44 = sbr.rel (0) target = $region25
    $region24: #{timestep_embedding_forward.1} parent=1 // pred_region
      %45 = dma.done [#allocation6], 4096
    $region25: #{timestep_embedding_forward.1} parent=1 // pred_fallthru
      _
    %v47 = vld [vmem:[%s0] sm:$0xf]
    %v48 = vld [vmem:[%s0 + $0x4] sm:$0xf]
    %v49 = vld [vmem:[#allocation2] sm:$0xff]
    %v50 = vld [vmem:[#allocation2 + $0x8] sm:$0xff]
    %v51 = vld [vmem:[#allocation2 + $0x10] sm:$0xff]
    %v52 = vld [vmem:[#allocation2 + $0x18] sm:$0xff]
    %v53 = vld [vmem:[#allocation2 + $0x20] sm:$0xff]
    %v54 = vld [vmem:[#allocation2 + $0x28] sm:$0xff]
    %v55 = vld [vmem:[#allocation2 + $0x30] sm:$0xff]
    %v56 = vld [vmem:[#allocation2 + $0x38] sm:$0xff]
    %v57 = vld [vmem:[%s2] sm:$0x3]
    %v59 = vlaneseq
    %v60 = vshrl.u32 %v59, 7
    %v61 = vsub.s32 0, %v60
    %v62 = vrot.slane %v57, %v61
    %v63 = vlaneseq
    %v64 = vshrl.u32 %v63, 7
    %v65 = vsub.s32 1, %v64
    %v66 = vrot.slane %v57, %v65
    %v71 = vunpack.c.l.b16 %v47
    %v72 = vunpack.c.l.b16 %v48
    %v73 = vpack.c.b16 %v72, %v71
    %v82 = vunpack.c.l.b16 %v49
    %v83 = vunpack.c.h.b16 %v49
    %v84 = vunpack.c.l.b16 %v50
    %v85 = vunpack.c.h.b16 %v50
    %v86 = vunpack.c.l.b16 %v51
    %v87 = vunpack.c.h.b16 %v51
    %v88 = vunpack.c.l.b16 %v52
    %v89 = vunpack.c.h.b16 %v52
    %v90 = vunpack.c.l.b16 %v53
    %v91 = vunpack.c.h.b16 %v53
    %v92 = vunpack.c.l.b16 %v54
    %v93 = vunpack.c.h.b16 %v54
    %v94 = vunpack.c.l.b16 %v55
    %v95 = vunpack.c.h.b16 %v55
    %v96 = vunpack.c.l.b16 %v56
    %v97 = vunpack.c.h.b16 %v56
    %v98 = vpack.c.b16 %v84, %v82
    %v99 = vpack.c.b16 %v85, %v83
    %v100 = vpack.c.b16 %v88, %v86
    %v101 = vpack.c.b16 %v89, %v87
    %v102 = vpack.c.b16 %v92, %v90
    %v103 = vpack.c.b16 %v93, %v91
    %v104 = vpack.c.b16 %v96, %v94
    %v105 = vpack.c.b16 %v97, %v95
    %vm114 = vcmask 523264
    %v116 = vsel %vm114, %v73, 0
    %118 = vmatprep.subr.bf16.mxu0 %v99
    %119 = vmatpush1.bf16.msra.mxu0 %v98
    %120 = vmatprep.subr.bf16.mxu0 %v101
    %121 = vmatpush1.bf16.msra.mxu0 %v100
    %122 = vmatprep.subr.bf16.mxu0 %v103
    %123 = vmatpush1.bf16.msra.mxu0 %v102
    %124 = vmatprep.subr.bf16.mxu0 %v105
    %125 = vmatpush1.bf16.msra.mxu0 %v104
    %126 = vmatprep.subr.bf16.mxu0 0
    %127 = vmatpush1.bf16.msra.mxu0 0
    %128 = vmatprep.subr.bf16.mxu0 0
    %129 = vmatpush1.bf16.msra.mxu0 0
    %130 = vmatprep.subr.bf16.mxu0 0
    %131 = vmatpush1.bf16.msra.mxu0 0
    %132 = vmatprep.subr.bf16.mxu0 0
    %133 = vmatpush1.bf16.msra.mxu0 0
    %134 = vmatprep.subr.bf16.mxu0 0
    %135 = vmatpush1.bf16.msra.mxu0 0
    %136 = vmatprep.subr.bf16.mxu0 0
    %137 = vmatpush1.bf16.msra.mxu0 0
    %138 = vmatprep.subr.bf16.mxu0 0
    %139 = vmatpush1.bf16.msra.mxu0 0
    %140 = vmatprep.subr.bf16.mxu0 0
    %141 = vmatpush1.bf16.msra.mxu0 0
    %142 = vmatprep.subr.bf16.mxu0 0
    %143 = vmatpush1.bf16.msra.mxu0 0
    %144 = vmatprep.subr.bf16.mxu0 0
    %145 = vmatpush1.bf16.msra.mxu0 0
    %146 = vmatprep.subr.bf16.mxu0 0
    %147 = vmatpush1.bf16.msra.mxu0 0
    %148 = vmatprep.subr.bf16.mxu0 0
    %149 = vmatpush1.bf16.msra.mxu0 0
    %150 = vmatprep.mubr.bf16.mxu0 0
    %151 = vmatmul.mubr.bf16.gmra.mrb[0].mxu0 %v116
    %v152 = vpop.f32.mrb[0].mxu0
    %v153 = vadd.f32 %v62, %v152
    %v154 = vpop.f32.mrb[0].mxu0
    %v155 = vadd.f32 %v66, %v154
    %v156 = vpop.f32.mrb[0].mxu0
    %v157 = vadd.f32 %v62, %v156
    %v158 = vpop.f32.mrb[0].mxu0
    %v159 = vadd.f32 %v66, %v158
    %160 = vdwg.mxu0
    %v161 = vxor.u32 %v153, 2147483648
    %v162 = vxor.u32 %v155, 2147483648
    %v163 = vxor.u32 %v157, 2147483648
    %v164 = vxor.u32 %v159, 2147483648
    %v165 = vmul.f32 %v161, 1.442695
    %v166 = vpow.pop %v165
    %v167 = vmul.f32 %v162, 1.442695
    %v168 = vpow.pop %v167
    %v169 = vmul.f32 %v163, 1.442695
    %v170 = vpow.pop %v169
    %v171 = vmul.f32 %v164, 1.442695
    %v172 = vpow.pop %v171
    %v173 = vadd.f32 %v166, 1.0
    %v174 = vadd.f32 %v168, 1.0
    %v175 = vadd.f32 %v170, 1.0
    %v176 = vadd.f32 %v172, 1.0
    %v177 = vrcp.pop %v173
    %v178 = vmul.f32 1.0, %v177
    %v179 = vrcp.pop %v174
    %v180 = vmul.f32 1.0, %v179
    %v181 = vrcp.pop %v175
    %v182 = vmul.f32 1.0, %v181
    %v183 = vrcp.pop %v176
    %v184 = vmul.f32 1.0, %v183
    %v185 = vmul.f32 %v153, %v178
    %v186 = vmul.f32 %v155, %v180
    %v187 = vmul.f32 %v157, %v182
    %v188 = vmul.f32 %v159, %v184
    %v189 = vpack.c.bf16 %v187, %v185
    %v190 = vpack.c.bf16 %v188, %v186
    %v191 = vld [vmem:[#allocation5] sm:$0xff]
    %v192 = vld [vmem:[#allocation5 + $0x8] sm:$0xff]
    %v193 = vld [vmem:[#allocation5 + $0x10] sm:$0xff]
    %v194 = vld [vmem:[#allocation5 + $0x18] sm:$0xff]
    %v195 = vld [vmem:[#allocation5 + $0x20] sm:$0xff]
    %v196 = vld [vmem:[#allocation5 + $0x28] sm:$0xff]
    %v197 = vld [vmem:[#allocation5 + $0x30] sm:$0xff]
    %v198 = vld [vmem:[#allocation5 + $0x38] sm:$0xff]
    %v199 = vld [vmem:[#allocation5 + $0x40] sm:$0xff]
    %v200 = vld [vmem:[#allocation5 + $0x48] sm:$0xff]
    %v201 = vld [vmem:[#allocation5 + $0x50] sm:$0xff]
    %v202 = vld [vmem:[#allocation5 + $0x58] sm:$0xff]
    %v203 = vld [vmem:[#allocation5 + $0x60] sm:$0xff]
    %v204 = vld [vmem:[#allocation5 + $0x68] sm:$0xff]
    %v205 = vld [vmem:[#allocation5 + $0x70] sm:$0xff]
    %v206 = vld [vmem:[#allocation5 + $0x78] sm:$0xff]
    %v207 = vld [vmem:[#allocation5 + $0x80] sm:$0xff]
    %v208 = vld [vmem:[#allocation5 + $0x88] sm:$0xff]
    %v209 = vld [vmem:[#allocation5 + $0x90] sm:$0xff]
    %v210 = vld [vmem:[#allocation5 + $0x98] sm:$0xff]
    %v211 = vld [vmem:[#allocation5 + $0xa0] sm:$0xff]
    %v212 = vld [vmem:[#allocation5 + $0xa8] sm:$0xff]
    %v213 = vld [vmem:[#allocation5 + $0xb0] sm:$0xff]
    %v214 = vld [vmem:[#allocation5 + $0xb8] sm:$0xff]
    %v215 = vld [vmem:[#allocation5 + $0xc0] sm:$0xff]
    %v216 = vld [vmem:[#allocation5 + $0xc8] sm:$0xff]
    %v217 = vld [vmem:[#allocation5 + $0xd0] sm:$0xff]
    %v218 = vld [vmem:[#allocation5 + $0xd8] sm:$0xff]
    %v219 = vld [vmem:[#allocation5 + $0xe0] sm:$0xff]
    %v220 = vld [vmem:[#allocation5 + $0xe8] sm:$0xff]
    %v221 = vld [vmem:[#allocation5 + $0xf0] sm:$0xff]
    %v222 = vld [vmem:[#allocation5 + $0xf8] sm:$0xff]
    %v255 = vunpack.c.l.b16 %v191
    %v256 = vunpack.c.h.b16 %v191
    %v257 = vunpack.c.l.b16 %v192
    %v258 = vunpack.c.h.b16 %v192
    %v259 = vunpack.c.l.b16 %v193
    %v260 = vunpack.c.h.b16 %v193
    %v261 = vunpack.c.l.b16 %v194
    %v262 = vunpack.c.h.b16 %v194
    %v263 = vunpack.c.l.b16 %v195
    %v264 = vunpack.c.h.b16 %v195
    %v265 = vunpack.c.l.b16 %v196
    %v266 = vunpack.c.h.b16 %v196
    %v267 = vunpack.c.l.b16 %v197
    %v268 = vunpack.c.h.b16 %v197
    %v269 = vunpack.c.l.b16 %v198
    %v270 = vunpack.c.h.b16 %v198
    %v271 = vunpack.c.l.b16 %v199
    %v272 = vunpack.c.h.b16 %v199
    %v273 = vunpack.c.l.b16 %v200
    %v274 = vunpack.c.h.b16 %v200
    %v275 = vunpack.c.l.b16 %v201
    %v276 = vunpack.c.h.b16 %v201
    %v277 = vunpack.c.l.b16 %v202
    %v278 = vunpack.c.h.b16 %v202
    %v279 = vunpack.c.l.b16 %v203
    %v280 = vunpack.c.h.b16 %v203
    %v281 = vunpack.c.l.b16 %v204
    %v282 = vunpack.c.h.b16 %v204
    %v283 = vunpack.c.l.b16 %v205
    %v284 = vunpack.c.h.b16 %v205
    %v285 = vunpack.c.l.b16 %v206
    %v286 = vunpack.c.h.b16 %v206
    %v287 = vunpack.c.l.b16 %v207
    %v288 = vunpack.c.h.b16 %v207
    %v289 = vunpack.c.l.b16 %v208
    %v290 = vunpack.c.h.b16 %v208
    %v291 = vunpack.c.l.b16 %v209
    %v292 = vunpack.c.h.b16 %v209
    %v293 = vunpack.c.l.b16 %v210
    %v294 = vunpack.c.h.b16 %v210
    %v295 = vunpack.c.l.b16 %v211
    %v296 = vunpack.c.h.b16 %v211
    %v297 = vunpack.c.l.b16 %v212
    %v298 = vunpack.c.h.b16 %v212
    %v299 = vunpack.c.l.b16 %v213
    %v300 = vunpack.c.h.b16 %v213
    %v301 = vunpack.c.l.b16 %v214
    %v302 = vunpack.c.h.b16 %v214
    %v303 = vunpack.c.l.b16 %v215
    %v304 = vunpack.c.h.b16 %v215
    %v305 = vunpack.c.l.b16 %v216
    %v306 = vunpack.c.h.b16 %v216
    %v307 = vunpack.c.l.b16 %v217
    %v308 = vunpack.c.h.b16 %v217
    %v309 = vunpack.c.l.b16 %v218
    %v310 = vunpack.c.h.b16 %v218
    %v311 = vunpack.c.l.b16 %v219
    %v312 = vunpack.c.h.b16 %v219
    %v313 = vunpack.c.l.b16 %v220
    %v314 = vunpack.c.h.b16 %v220
    %v315 = vunpack.c.l.b16 %v221
    %v316 = vunpack.c.h.b16 %v221
    %v317 = vunpack.c.l.b16 %v222
    %v318 = vunpack.c.h.b16 %v222
    %v319 = vpack.c.b16 %v257, %v255
    %v320 = vpack.c.b16 %v258, %v256
    %v321 = vpack.c.b16 %v261, %v259
    %v322 = vpack.c.b16 %v262, %v260
    %v323 = vpack.c.b16 %v265, %v263
    %v324 = vpack.c.b16 %v266, %v264
    %v325 = vpack.c.b16 %v269, %v267
    %v326 = vpack.c.b16 %v270, %v268
    %v327 = vpack.c.b16 %v273, %v271
    %v328 = vpack.c.b16 %v274, %v272
    %v329 = vpack.c.b16 %v277, %v275
    %v330 = vpack.c.b16 %v278, %v276
    %v331 = vpack.c.b16 %v281, %v279
    %v332 = vpack.c.b16 %v282, %v280
    %v333 = vpack.c.b16 %v285, %v283
    %v334 = vpack.c.b16 %v286, %v284
    %v335 = vpack.c.b16 %v289, %v287
    %v336 = vpack.c.b16 %v290, %v288
    %v337 = vpack.c.b16 %v293, %v291
    %v338 = vpack.c.b16 %v294, %v292
    %v339 = vpack.c.b16 %v297, %v295
    %v340 = vpack.c.b16 %v298, %v296
    %v341 = vpack.c.b16 %v301, %v299
    %v342 = vpack.c.b16 %v302, %v300
    %v343 = vpack.c.b16 %v305, %v303
    %v344 = vpack.c.b16 %v306, %v304
    %v345 = vpack.c.b16 %v309, %v307
    %v346 = vpack.c.b16 %v310, %v308
    %v347 = vpack.c.b16 %v313, %v311
    %v348 = vpack.c.b16 %v314, %v312
    %v349 = vpack.c.b16 %v317, %v315
    %v350 = vpack.c.b16 %v318, %v316
    %383 = vmatprep.subr.bf16.mxu0 %v320
    %384 = vmatpush1.bf16.msra.mxu0 %v319
    %385 = vmatprep.subr.bf16.mxu0 %v322
    %386 = vmatpush1.bf16.msra.mxu0 %v321
    %387 = vmatprep.subr.bf16.mxu0 %v324
    %388 = vmatpush1.bf16.msra.mxu0 %v323
    %389 = vmatprep.subr.bf16.mxu0 %v326
    %390 = vmatpush1.bf16.msra.mxu0 %v325
    %391 = vmatprep.subr.bf16.mxu0 %v328
    %392 = vmatpush1.bf16.msra.mxu0 %v327
    %393 = vmatprep.subr.bf16.mxu0 %v330
    %394 = vmatpush1.bf16.msra.mxu0 %v329
    %395 = vmatprep.subr.bf16.mxu0 %v332
    %396 = vmatpush1.bf16.msra.mxu0 %v331
    %397 = vmatprep.subr.bf16.mxu0 %v334
    %398 = vmatpush1.bf16.msra.mxu0 %v333
    %399 = vmatprep.subr.bf16.mxu0 %v336
    %400 = vmatpush1.bf16.msra.mxu0 %v335
    %401 = vmatprep.subr.bf16.mxu0 %v338
    %402 = vmatpush1.bf16.msra.mxu0 %v337
    %403 = vmatprep.subr.bf16.mxu0 %v340
    %404 = vmatpush1.bf16.msra.mxu0 %v339
    %405 = vmatprep.subr.bf16.mxu0 %v342
    %406 = vmatpush1.bf16.msra.mxu0 %v341
    %407 = vmatprep.subr.bf16.mxu0 %v344
    %408 = vmatpush1.bf16.msra.mxu0 %v343
    %409 = vmatprep.subr.bf16.mxu0 %v346
    %410 = vmatpush1.bf16.msra.mxu0 %v345
    %411 = vmatprep.subr.bf16.mxu0 %v348
    %412 = vmatpush1.bf16.msra.mxu0 %v347
    %413 = vmatprep.subr.bf16.mxu0 %v350
    %414 = vmatpush1.bf16.msra.mxu0 %v349
    %415 = vmatprep.mubr.bf16.mxu0 %v190
    %416 = vmatmul.mubr.bf16.gmra.mrb[0].mxu0 %v189
    %v417 = vpop.f32.mrb[0].mxu0
    %v418 = vadd.f32 0.0, %v417
    %v419 = vpop.f32.mrb[0].mxu0
    %v420 = vadd.f32 0.0, %v419
    %v421 = vpop.f32.mrb[0].mxu0
    %v422 = vadd.f32 0.0, %v421
    %v423 = vpop.f32.mrb[0].mxu0
    %v424 = vadd.f32 0.0, %v423
    %425 = vdwg.mxu0
    %426 = vst [vmem:[#allocation7] sm:$0xff] %v418
    %427 = vst [vmem:[#allocation7 + $0x8] sm:$0xff] %v420
    %428 = vst [vmem:[#allocation7 + $0x10] sm:$0xff] %v422
    %429 = vst [vmem:[#allocation7 + $0x18] sm:$0xff] %v424
    // Predicated region
    $region26: #{timestep_embedding_forward.1} parent=1 // pred_check
      _
    $region27: #{timestep_embedding_forward.1} parent=1 // pred_check_branch
      %431 = sbr.rel (0) target = $region29
    $region28: #{timestep_embedding_forward.1} parent=1 // pred_region
      %s433 = ssub.s32 512, 512
      %434 = vsyncadd [#allocation4], %s433
      %s435 = sshll.u32 [#allocation7], 4
      %s436 = int_to_ptr.vmem [resolvable:$true] %s435
      %441 = dma.vmem_to_hbm [thread:$0]  %s436, 512, %s4, [#allocation4], 256, 256, 16
    $region29: #{timestep_embedding_forward.1} parent=1 // pred_fallthru
      _
    // Predicated region
    $region30: #{timestep_embedding_forward.1} parent=1 // pred_check
      _
    $region31: #{timestep_embedding_forward.1} parent=1 // pred_check_branch
      %443 = sbr.rel (0) target = $region33
    $region32: #{timestep_embedding_forward.1} parent=1 // pred_region
      %444 = dma.done [#allocation4], 512
    $region33: #{timestep_embedding_forward.1} parent=1 // pred_fallthru
      _
    %445 = vsyncpa [#allocation3], 1
    %446 = vsyncpa [#allocation6], 1
    %447 = vsyncpa [#allocation4], 1

</llo_original>
